<compile_context>
chip_gen: v7x
topology: tpu7x:2x2x1
jax: 0.10.0
libtpu: 0.0.40
codegen_flags: <defaults>
</compile_context>

<pallas_src>
import jax
import jax.numpy as jnp
from jax.experimental import pallas as pl
from jax.experimental.pallas import tpu as pltpu


def _color_correct_kernel(w_sref, b_sref, x_ref, o_ref):
    """w_sref, b_sref: (B*C,) f32 scalars in SMEM (scalar prefetch).
    x_ref, o_ref: (1, TH, W) tile of one (batch, channel) plane."""
    i = pl.program_id(0)                 # flat (batch * channel) plane index
    w = w_sref[i]
    b = b_sref[i]
    o_ref[...] = (x_ref[...] * w + b).astype(o_ref.dtype)


def _pick_row_tile(H, W, itemsize, target_bytes=2 << 20):
    """Largest row-tile TH that divides H, keeps the block <= ~2 MiB, and is
    either a multiple of 8 or the full height (TPU (8,128) block rule)."""
    if H * W * itemsize <= target_bytes:
        return H
    for th in range(H - 1, 0, -1):
        if H % th == 0 and th % 8 == 0 and th * W * itemsize <= target_bytes:
            return th
    return H  # fallback: whole-plane block


def color_correction_forward(texture, cam, weight_anchor, bias_anchor,
                             weight, bias):
    """texture: (B, C, H, W); cam: (B,) int32 camera index per sample.
    weight_anchor/bias_anchor: (1, C, 1, 1); weight/bias: (n_cameras-1, C, 1, 1).
    Returns (B, C, H, W) = texture * weights[cam] + biases[cam]."""
    B, C, H, W = texture.shape

    # --- tiny glue: build per-sample per-channel scalars (B*C of each) ---
    weights_all = jnp.concatenate([weight_anchor, weight], axis=0)   # (n_cam, C, 1, 1)
    biases_all = jnp.concatenate([bias_anchor, bias], axis=0)
    w_flat = weights_all[cam, :, 0, 0].astype(jnp.float32).reshape(B * C)
    b_flat = biases_all[cam, :, 0, 0].astype(jnp.float32).reshape(B * C)

    # free, contiguous reshape: one plane per flattened (b, c) index
    x_planes = texture.reshape(B * C, H, W)

    th = _pick_row_tile(H, W, texture.dtype.itemsize)
    grid = (B * C, H // th)

    out = pl.pallas_call(
        _color_correct_kernel,
        out_shape=jax.ShapeDtypeStruct((B * C, H, W), texture.dtype),
        grid_spec=pltpu.PrefetchScalarGridSpec(
            num_scalar_prefetch=2,          # w_flat, b_flat -> SMEM
            grid=grid,
            in_specs=[
                pl.BlockSpec((1, th, W), lambda i, j, w_s, b_s: (i, j, 0)),
            ],
            out_specs=pl.BlockSpec((1, th, W), lambda i, j, w_s, b_s: (i, j, 0)),
        ),
        compiler_params=pltpu.CompilerParams(
            dimension_semantics=("parallel", "parallel")),
    )(w_flat, b_flat, x_planes)

    return out.reshape(B, C, H, W)


if __name__ == "__main__":
    key = jax.random.PRNGKey(0)
    k1, k2, k3 = jax.random.split(key, 3)

    n_cameras, C, B, H, W = 4, 3, 2, 16, 16

    texture = jax.random.normal(k1, (B, C, H, W), jnp.float32)
    # Module parameters: anchor camera is identity (ones / zeros), rest learned.
    weight_anchor = jnp.ones((1, C, 1, 1), jnp.float32)
    bias_anchor = jnp.zeros((1, C, 1, 1), jnp.float32)
    weight = 1.0 + 0.1 * jax.random.normal(k2, (n_cameras - 1, C, 1, 1), jnp.float32)
    bias = 0.1 * jax.random.normal(k3, (n_cameras - 1, C, 1, 1), jnp.float32)
    cam = jnp.array([0, 2], dtype=jnp.int32)   # per-sample camera indices

    out = color_correction_forward(texture, cam, weight_anchor, bias_anchor,
                                   weight, bias)
    out = jax.block_until_ready(out)
    assert out.shape == (B, C, H, W)

    # Reference: direct gather + broadcast affine (matches the PyTorch forward).
    weights_all = jnp.concatenate([weight_anchor, weight], axis=0)
    biases_all = jnp.concatenate([bias_anchor, bias], axis=0)
    ref = texture * weights_all[cam] + biases_all[cam]

    err = float(jnp.max(jnp.abs(out - ref)))
    assert jnp.allclose(out, ref, atol=1e-6, rtol=1e-6), f"max abs err = {err}"
    print("KERNEL_OK")
</pallas_src>

<mosaic_0001>
module attributes {stable_mosaic.version = 11 : i64} {
  func.func @_color_correct_kernel(%arg0: i32, %arg1: i32, %arg2: memref<6xf32, #tpu.memory_space<smem>>, %arg3: memref<6xf32, #tpu.memory_space<smem>>, %arg4: memref<1x16x16xf32, #tpu.memory_space<vmem>>, %arg5: memref<1x16x16xf32, #tpu.memory_space<vmem>>) attributes {dimension_semantics = [#tpu.dimension_semantics<parallel>, #tpu.dimension_semantics<parallel>], iteration_bounds = array<i64: 6, 1>, scalar_prefetch = 2 : i64, scratch_operands = 0 : i64, tpu.core_type = #tpu.core_type<tc>, window_params = [{transform_indices = @transform_0, window_bounds = array<i64: 1, 16, 16>}, {transform_indices = @transform_1, window_bounds = array<i64: 1, 16, 16>}]} {
    %0 = arith.index_cast %arg0 : i32 to index
    %1 = memref.load %arg2[%0] : memref<6xf32, #tpu.memory_space<smem>>
    %2 = arith.index_cast %arg0 : i32 to index
    %3 = memref.load %arg3[%2] : memref<6xf32, #tpu.memory_space<smem>>
    %c0 = arith.constant 0 : index
    %c0_0 = arith.constant 0 : index
    %c0_1 = arith.constant 0 : index
    %4 = vector.load %arg4[%c0, %c0_0, %c0_1] : memref<1x16x16xf32, #tpu.memory_space<vmem>>, vector<1x16x16xf32>
    %5 = vector.broadcast %1 : f32 to vector<1x16x16xf32>
    %6 = arith.mulf %4, %5 : vector<1x16x16xf32>
    %7 = vector.broadcast %3 : f32 to vector<1x16x16xf32>
    %8 = arith.addf %6, %7 : vector<1x16x16xf32>
    %c0_2 = arith.constant 0 : index
    %c0_3 = arith.constant 0 : index
    %c0_4 = arith.constant 0 : index
    %9 = vector.load %arg5[%c0_2, %c0_3, %c0_4] : memref<1x16x16xf32, #tpu.memory_space<vmem>>, vector<1x16x16xf32>
    tpu.vector_store %arg5[%c0_2, %c0_3, %c0_4], %8 {strides = array<i32>} : memref<1x16x16xf32, #tpu.memory_space<vmem>>, vector<1x16x16xf32>,
    return
  }
  func.func @transform_0(%arg0: i32, %arg1: i32, %arg2: memref<6xf32, #tpu.memory_space<smem>>, %arg3: memref<6xf32, #tpu.memory_space<smem>>) -> (i32, i32, i32) {
    %c0_i32 = arith.constant 0 : i32
    %c0_i32_0 = arith.constant 0 : i32
    return %arg0, %arg1, %c0_i32 : i32, i32, i32
  }
  func.func @transform_1(%arg0: i32, %arg1: i32, %arg2: memref<6xf32, #tpu.memory_space<smem>>, %arg3: memref<6xf32, #tpu.memory_space<smem>>) -> (i32, i32, i32) {
    %c0_i32 = arith.constant 0 : i32
    %c0_i32_0 = arith.constant 0 : i32
    return %arg0, %arg1, %c0_i32 : i32, i32, i32
  }
}

</mosaic_0001>

<llo_original>
// kernel: tpu_custom_call.1
$region0: #{tpu_custom_call.1}
  #allocation0 [shape = 'u32[]', space=smem, size = 0x4, offset = 0x4, fixed_abs, tag = 'smem constant byte address 0x4 - core index']
  #allocation1 [shape = 'u32[144,128]{1,0:T(1,128)}', space=vmem, size = 0x12000, scoped, tag = 'internal scratch']
  #allocation2 [shape = 's32[1]{0}', space=sflag, size = 0x4, scoped, tag = 'scoped memory for tpu_custom_call.1']
  #allocation3 [shape = 'u8[512]{0}', space=smem, size = 0x200, scoped, tag = 'prefetched SMEM operand 0']
  #allocation4 [shape = 'u8[512]{0}', space=smem, size = 0x200, scoped, tag = 'prefetched SMEM operand 1']
  %s0 = inlined_call_operand.hbm [shape: f32[6], index: 0, kind: input, shape index: {}]
  %s1 = inlined_call_operand.vmem [shape: f32[6], index: 1, kind: input, shape index: {}]
  %s2 = inlined_call_operand.hbm [shape: f32[6,16,16], index: 2, kind: input, shape index: {}]
  %s3 = inlined_call_operand.hbm [shape: f32[6,16,16], index: 3, kind: output, shape index: {}]
  %s4 = sld [smem:[#allocation0]]
  $region41: #{tpu_custom_call.1} parent=0
    _
  %s6 = ssub.s32 1, %s4
  %s7 = scalar_select 0, %s6, %s4
  %9 = dma.hbm_to_smem %s0, 16, [#allocation3], [#allocation2]
  %s10 = sshll.u32 %s1, 4
  %s11 = int_to_ptr.vmem [resolvable:$true] %s10
  %13 = dma.vmem_to_smem %s11, 16, [#allocation4], [#allocation2]
  %14 = dma.done [#allocation2], 32
  %15 = sfence
  $region1: #{tpu_custom_call.1} parent=0
    #allocation5 [shape = 'u8[16384]{0}', space=vmem, size = 0x4000, scoped, tag = 'input window, operand 2']
    #allocation6 [shape = 's32[2]{0}', space=sflag, size = 0x8, scoped, tag = 'scoped memory for tpu_custom_call.1']
    #allocation7 [shape = 's32[2]{0}', space=sflag, size = 0x8, scoped, tag = 'scoped memory for tpu_custom_call.1']
    #allocation8 [shape = 'u8[16384]{0}', space=vmem, size = 0x4000, scoped, tag = 'output window, operand 0']
    %16 = vsyncpa [#allocation6], 0
    %s17 = scalar_lea.sflag [#allocation6], 1
    %18 = vsyncpa %s17, 0
    %19 = vsyncpa [#allocation7], 0
    %s20 = scalar_lea.sflag [#allocation7], 1
    %21 = vsyncpa %s20, 0
    loop: start=0, step=1, limit=8
    $region2: #{tpu_custom_call.1} parent=1 // loop_pre_header
      _
    $region3: #{tpu_custom_call.1} parent=1 // loop_header
      %s23 = sphi 0, %s27
      %p24 = scmp.ge.s32.totalorder %s23, 8
      %s30 = sphi 0, %s42
      %s31 = sphi 0, %s38
      %s32 = sphi 0, %s30
      %s33 = sphi 0, %s31
      %s34 = sphi 0, %s32
      %s35 = sphi 0, %s33
      %s47 = sphi 0, %s49
      %s50 = sphi 0, %s47
      %s51 = sphi 0, %s50
      %s67 = sphi 0, %s51
      %s75 = sphi 0, %s77
      %s78 = sphi 0, %s75
      %s79 = sphi 0, %s78
      %s95 = sphi 0, %s79
    $region4: #{tpu_custom_call.1} parent=1 // loop_header_branch
      %26 = sbr.rel (%p24) target = $region8
    $region5: #{tpu_custom_call.1} parent=1 // loop_body
      %s28 = ssub.s32 %s23, 1
      %s29 = ssub.s32 %s23, 2
      %s36 = sadd.s32 1, %s31
      %p37 = scmp.ge.s32.totalorder %s36, 1
      %s38 = scalar_select %p37, 0, %s36
      %s39 = sadd.s32 1, %s30
      %s40 = scalar_select %p37, %s39, %s30
      %p41 = scmp.ge.s32.totalorder %s40, 6
      %s42 = scalar_select %p41, 0, %s40
      %s43 = ssub.s32 %s30, %s42
      %s44 = ssub.s32 %s31, %s38
      %s45 = sor.u32 %s43, %s44
      %p46 = scmp.eq.s32.totalorder %s45, 0
      %s48 = sadd.s32 %s47, 1
      %s49 = scalar_select %p46, %s47, %s48
      %p52 = pneg %p46
      %p53 = scmp.eq.s32.totalorder %s23, 5
      %p54 = por %p52, %p53
      %p55 = scmp.ne.s32.totalorder %s47, %s50
      %p56 = scmp.eq.s32.totalorder %s23, 0
      %p57 = por %p55, %p56
      %p58 = scmp.ne.s32.totalorder %s47, %s50
      %p59 = scmp.eq.s32.totalorder %s28, 5
      %p60 = por %p58, %p59
      %p61 = scmp.ne.s32.totalorder %s50, %s51
      %p62 = scmp.eq.s32.totalorder %s28, 0
      %p63 = por %p61, %p62
      %p64 = scmp.ne.s32.totalorder %s50, %s51
      %p65 = scmp.eq.s32.totalorder %s29, 5
      %p66 = por %p64, %p65
      %p68 = scmp.ne.s32.totalorder %s51, %s67
      %p69 = scmp.eq.s32.totalorder %s29, 0
      %p70 = por %p68, %p69
      %s71 = ssub.s32 %s30, %s42
      %s72 = ssub.s32 %s31, %s38
      %s73 = sor.u32 %s71, %s72
      %p74 = scmp.eq.s32.totalorder %s73, 0
      %s76 = sadd.s32 %s75, 1
      %s77 = scalar_select %p74, %s75, %s76
      %p80 = pneg %p74
      %p81 = scmp.eq.s32.totalorder %s23, 5
      %p82 = por %p80, %p81
      %p83 = scmp.ne.s32.totalorder %s75, %s78
      %p84 = scmp.eq.s32.totalorder %s23, 0
      %p85 = por %p83, %p84
      %p86 = scmp.ne.s32.totalorder %s75, %s78
      %p87 = scmp.eq.s32.totalorder %s28, 5
      %p88 = por %p86, %p87
      %p89 = scmp.ne.s32.totalorder %s78, %s79
      %p90 = scmp.eq.s32.totalorder %s28, 0
      %p91 = por %p89, %p90
      %p92 = scmp.ne.s32.totalorder %s78, %s79
      %p93 = scmp.eq.s32.totalorder %s29, 5
      %p94 = por %p92, %p93
      %p96 = scmp.ne.s32.totalorder %s79, %s95
      %p97 = scmp.eq.s32.totalorder %s29, 0
      %p98 = por %p96, %p97
      %p99 = scmp.le.s32.totalorder 1, %s23
      %p100 = scmp.lt.s32.totalorder %s23, 7
      %p101 = pnand %p99, %p100
      %p102 = pneg %p101
      // Predicated region
      $region9: #{tpu_custom_call.1} parent=5 // pred_check
        _
      $region10: #{tpu_custom_call.1} parent=5 // pred_check_branch
        %104 = sbr.rel (%p101) target = $region12
      $region11: #{tpu_custom_call.1} parent=5 // pred_region
        %s105 = ssub.s32 %s23, 1
      $region12: #{tpu_custom_call.1} parent=5 // pred_fallthru
        _
      %p106 = scmp.lt.s32.totalorder %s23, 6
      // Predicated region
      $region13: #{tpu_custom_call.1} parent=5 // pred_check
        %p107 = pneg %p106
      $region14: #{tpu_custom_call.1} parent=5 // pred_check_branch
        %109 = sbr.rel (%p107) target = $region16
      $region15: #{tpu_custom_call.1} parent=5 // pred_region
        // Predicated region
        $region17: #{tpu_custom_call.1} parent=15 // pred_check
          %p110 = pneg %p57
        $region18: #{tpu_custom_call.1} parent=15 // pred_check_branch
          %112 = sbr.rel (%p110) target = $region20
        $region19: #{tpu_custom_call.1} parent=15 // pred_region
          %s113 = sand.u32 %s47, 1
          %s114 = scalar_lea.sflag [#allocation6], %s113
          %s115 = sand.u32 %s47, 1
          %s116 = smul.addr %s115, 16
          %s117 = scalar_lea.vmem [#allocation5], %s116
          %s118 = smul.u32 2, %s31
          %s120 = ssub.s32 256, 256
          %121 = vsyncadd %s114, %s120
          %s122 = smul.addr %s30, 2
          %s123 = sadd.s32 %s118, %s122
          %s124 = smul.addr %s123, 128
          %s125 = scalar_lea.hbm %s2, %s124
          %s126 = sshll.u32 %s117, 4
          %s127 = int_to_ptr.vmem [resolvable:$true] %s126
          %132 = dma.hbm_to_vmem [thread:$0]  %s125, 256, %s127, %s114, 128, 128, 8
        $region20: #{tpu_custom_call.1} parent=15 // pred_fallthru
          _
      $region16: #{tpu_custom_call.1} parent=5 // pred_fallthru
        _
      %p133 = scmp.le.s32.totalorder 1, %s23
      %p134 = scmp.lt.s32.totalorder %s23, 7
      %p135 = pnand %p133, %p134
      %p136 = pneg %p135
      // Predicated region
      $region21: #{tpu_custom_call.1} parent=5 // pred_check
        _
      $region22: #{tpu_custom_call.1} parent=5 // pred_check_branch
        %138 = sbr.rel (%p135) target = $region24
      $region23: #{tpu_custom_call.1} parent=5 // pred_region
        %s139 = ssub.s32 %s23, 1
        %s140 = sand.u32 %s50, 1
        %s141 = scalar_lea.sflag [#allocation6], %s140
        %s142 = sand.u32 %s50, 1
        %s143 = smul.addr %s142, 16
        %s144 = scalar_lea.vmem [#allocation5], %s143
        // Predicated region
        $region25: #{tpu_custom_call.1} parent=23 // pred_check
          %p145 = pneg %p63
        $region26: #{tpu_custom_call.1} parent=23 // pred_check_branch
          %147 = sbr.rel (%p145) target = $region28
        $region27: #{tpu_custom_call.1} parent=23 // pred_region
          %148 = dma.done %s141, 256
        $region28: #{tpu_custom_call.1} parent=23 // pred_fallthru
          _
        %s149 = sand.u32 %s50, 1
        %s150 = scalar_lea.sflag [#allocation6], %s149
        %s151 = sand.u32 %s50, 1
        %s152 = smul.addr %s151, 16
        %s153 = scalar_lea.vmem [#allocation5], %s152
        %p154 = pneg %p63
        %p155 = pneg %p60
        %p156 = pneg %p91
        %p157 = pneg %p88
        %s158 = sand.u32 %s78, 1
        %s159 = scalar_lea.sflag [#allocation7], %s158
        %s160 = sand.u32 %s78, 1
        %s161 = smul.addr %s160, 16
        %s162 = scalar_lea.vmem [#allocation8], %s161
        %s163 = smul.u32 2, %s33
        %s164 = smul.u32 2, %s33
        %s165 = sld [smem:[#allocation3 + %s32]]
        %s166 = sld [smem:[#allocation4 + %s32]]
        %v167 = vld [vmem:[%s144] sm:$0xff]
        %v168 = vld [vmem:[%s144 + $0x8] sm:$0xff]
        %v169 = vstv %s165
        %v170 = vmul.f32 %v167, %v169
        %v171 = vmul.f32 %v168, %v169
        %v172 = vstv %s166
        %v173 = vadd.f32 %v170, %v172
        %v174 = vadd.f32 %v171, %v172
        %vm175 = vcmask 130048
        %176 = vst.msk [vmem:[%s162] sm:$0xff] %vm175, %v173
        %177 = vst.msk [vmem:[%s162 + $0x8] sm:$0xff] %vm175, %v174
        %s178 = sand.u32 %s78, 1
        %s179 = scalar_lea.sflag [#allocation7], %s178
        %s180 = sand.u32 %s78, 1
        %s181 = smul.addr %s180, 16
        %s182 = scalar_lea.vmem [#allocation8], %s181
        // Predicated region
        $region29: #{tpu_custom_call.1} parent=23 // pred_check
          %p183 = pneg %p88
        $region30: #{tpu_custom_call.1} parent=23 // pred_check_branch
          %185 = sbr.rel (%p183) target = $region32
        $region31: #{tpu_custom_call.1} parent=23 // pred_region
          %s186 = smul.u32 2, %s33
          %s188 = ssub.s32 256, 256
          %189 = vsyncadd %s179, %s188
          %s190 = smul.addr %s32, 2
          %s191 = sadd.s32 %s186, %s190
          %s192 = smul.addr %s191, 128
          %s193 = scalar_lea.hbm %s3, %s192
          %s194 = sshll.u32 %s182, 4
          %s195 = int_to_ptr.vmem [resolvable:$true] %s194
          %200 = dma.vmem_to_hbm [thread:$0]  %s195, 256, %s193, %s179, 128, 128, 8
        $region32: #{tpu_custom_call.1} parent=23 // pred_fallthru
          _
      $region24: #{tpu_custom_call.1} parent=5 // pred_fallthru
        _
      %p201 = scmp.le.s32.totalorder 2, %s23
      // Predicated region
      $region33: #{tpu_custom_call.1} parent=5 // pred_check
        %p202 = pneg %p201
      $region34: #{tpu_custom_call.1} parent=5 // pred_check_branch
        %204 = sbr.rel (%p202) target = $region36
      $region35: #{tpu_custom_call.1} parent=5 // pred_region
        %s205 = ssub.s32 %s23, 2
        // Predicated region
        $region37: #{tpu_custom_call.1} parent=35 // pred_check
          %p206 = pneg %p94
        $region38: #{tpu_custom_call.1} parent=35 // pred_check_branch
          %208 = sbr.rel (%p206) target = $region40
        $region39: #{tpu_custom_call.1} parent=35 // pred_region
          %s209 = sand.u32 %s79, 1
          %s210 = scalar_lea.sflag [#allocation7], %s209
          %s211 = sand.u32 %s79, 1
          %s212 = smul.addr %s211, 16
          %s213 = scalar_lea.vmem [#allocation8], %s212
          %214 = dma.done %s210, 256
        $region40: #{tpu_custom_call.1} parent=35 // pred_fallthru
          _
      $region36: #{tpu_custom_call.1} parent=5 // pred_fallthru
        _
    $region6: #{tpu_custom_call.1} parent=1 // loop_footer
      %s27 = sadd.s32 1, %s23
    $region7: #{tpu_custom_call.1} parent=1 // loop_footer_branch
      %22 = sbr.rel target = $region3
    $region8: #{tpu_custom_call.1} parent=1 // loop_exit
      _
    %215 = vsyncpa [#allocation6], 1
    %s216 = scalar_lea.sflag [#allocation6], 1
    %217 = vsyncpa %s216, 1
    %218 = vsyncpa [#allocation7], 1
    %s219 = scalar_lea.sflag [#allocation7], 1
    %220 = vsyncpa %s219, 1

</llo_original>
